<compile_context>
chip_gen: v5e
topology: v5e:2x2
jax: 0.10.0
libtpu: 0.0.40
codegen_flags: <defaults>
</compile_context>

<pallas_src>
import functools

import jax
import jax.numpy as jnp
from jax.experimental import pallas as pl
from jax.experimental.pallas import tpu as pltpu

HIDDEN = 128


def _hash_keep_mask(shape, tile_rows, tile_id_u32, seed_u32, threshold_u32):
    """Counter-based uniform bits -> keep mask (True = keep), unsigned compare."""
    # Global element index (row-major), independent of how the batch is tiled.
    row = jax.lax.broadcasted_iota(jnp.int32, shape, 0).astype(jnp.uint32)
    col = jax.lax.broadcasted_iota(jnp.int32, shape, 1).astype(jnp.uint32)
    row = row + tile_id_u32 * jnp.uint32(tile_rows)
    v = row * jnp.uint32(shape[1]) + col
    # Mix in the seed, then murmur3 fmix32 finalizer.
    v = v ^ (seed_u32 * jnp.uint32(0x9E3779B9))
    v = v ^ (v >> 16)
    v = v * jnp.uint32(0x85EBCA6B)
    v = v ^ (v >> 13)
    v = v * jnp.uint32(0xC2B2AE35)
    v = v ^ (v >> 16)
    return v >= threshold_u32


def policy_kernel(seed_ref, x_ref, w1b_ref, w2t_ref, b2_ref, o_ref,
                  *, training: bool, p_drop: float):
    S = w1b_ref.shape[0] - 1          # last row of w1b is the bias
    w1b = w1b_ref[...]                # (S+1, H)
    w1 = w1b[:S, :]                   # (S, H)
    b1 = w1b[S:, :]                   # (1, H)

    # ---- Linear 1: (TB, S) @ (S, H) + (1, H) ----
    x = x_ref[...]
    h = jnp.dot(x, w1, preferred_element_type=jnp.float32) + b1

    # ---- Dropout(p=0.5): integer-threshold keep mask from a counter hash ----
    if training and p_drop > 0.0:
        tb, hid = h.shape
        seed_u32 = seed_ref[0].astype(jnp.uint32)
        tile_u32 = pl.program_id(0).astype(jnp.uint32)
        thr = jnp.uint32(min(int(round(p_drop * (1 << 32))), (1 << 32) - 1))
        keep = _hash_keep_mask(h.shape, tb, tile_u32, seed_u32, thr)
        h = jnp.where(keep, h * (1.0 / (1.0 - p_drop)), 0.0)

    # ---- ReLU ----
    h = jnp.maximum(h, 0.0)

    # ---- Linear 2: (TB, H) . (A, H)^T + (1, A)  (w2 stored lane-dense, transposed) ----
    logits = jax.lax.dot_general(
        h, w2t_ref[...],
        dimension_numbers=(((1,), (1,)), ((), ())),
        preferred_element_type=jnp.float32,
    ) + b2_ref[...]

    # ---- Softmax(dim=-1), numerically stable ----
    m = jnp.max(logits, axis=-1, keepdims=True)
    e = jnp.exp(logits - m)
    o_ref[...] = (e / jnp.sum(e, axis=-1, keepdims=True)).astype(o_ref.dtype)


def policy_forward(x, packed_params, *, seed=0, training=True, p_drop=0.5,
                   block_b=128):
    """Policy forward pass in a single Pallas kernel, batch tiled over the grid."""
    w1b, w2t, b2 = packed_params       # (S+1, H), (A, H), (1, A)
    B, S = x.shape
    H = w1b.shape[1]
    A = w2t.shape[0]
    assert w1b.shape[0] == S + 1

    # Batch tile: multiple of 8 sublanes; pad the batch so it divides evenly.
    TB = min(block_b, 8 * pl.cdiv(B, 8))
    Bp = TB * pl.cdiv(B, TB)
    if Bp != B:
        x = jnp.pad(x, ((0, Bp - B), (0, 0)))

    seed_arr = jnp.array([seed], dtype=jnp.int32)
    kernel = functools.partial(policy_kernel, training=training, p_drop=p_drop)

    out = pl.pallas_call(
        kernel,
        out_shape=jax.ShapeDtypeStruct((Bp, A), jnp.float32),
        grid_spec=pltpu.PrefetchScalarGridSpec(
            num_scalar_prefetch=1,                     # seed lands in SMEM
            grid=(Bp // TB,),
            in_specs=[
                pl.BlockSpec((TB, S), lambda i, seed: (i, 0)),      # x (batch-tiled)
                pl.BlockSpec((S + 1, H), lambda i, seed: (0, 0)),   # w1 | b1 (resident)
                pl.BlockSpec((A, H), lambda i, seed: (0, 0)),       # w2^T   (resident)
                pl.BlockSpec((1, A), lambda i, seed: (0, 0)),       # b2     (resident)
            ],
            out_specs=pl.BlockSpec((TB, A), lambda i, seed: (i, 0)),
        ),
        compiler_params=pltpu.CompilerParams(
            dimension_semantics=("parallel",)),        # shard batch tiles across TCs (v7x)
    )(seed_arr, x, w1b, w2t, b2)

    return out[:B]


def init_policy_params(key, state_size, action_size, hidden=HIDDEN):
    """torch.nn.Linear-style init: U(-1/sqrt(fan_in), +1/sqrt(fan_in))."""
    k1, k2, k3, k4 = jax.random.split(key, 4)
    lim1 = 1.0 / jnp.sqrt(jnp.float32(state_size))
    lim2 = 1.0 / jnp.sqrt(jnp.float32(hidden))
    w1 = jax.random.uniform(k1, (state_size, hidden), jnp.float32, -lim1, lim1)
    b1 = jax.random.uniform(k2, (hidden,), jnp.float32, -lim1, lim1)
    w2 = jax.random.uniform(k3, (hidden, action_size), jnp.float32, -lim2, lim2)
    b2 = jax.random.uniform(k4, (action_size,), jnp.float32, -lim2, lim2)
    return w1, b1, w2, b2


def pack_policy_params(w1, b1, w2, b2):
    """One-time repack into kernel layout: bias fused into w1, w2 transposed (lane-dense)."""
    S, H = w1.shape
    A = w2.shape[1]
    w1b = jnp.concatenate([w1, b1.reshape(1, H)], axis=0)   # (S+1, H)
    w2t = jnp.transpose(w2)                                  # (A, H)
    b2r = b2.reshape(1, A)                                   # (1, A)
    return w1b, w2t, b2r


if __name__ == "__main__":
    # CartPole: state_size=4, action_size=2.  Batch of rollout states; batch is
    # tiled over the grid (block_b=128), so 256 exercises a 2-step grid.
    state_size, action_size, batch = 4, 2, 256

    key = jax.random.PRNGKey(0)
    pkey, xkey = jax.random.split(key)
    raw_params = init_policy_params(pkey, state_size, action_size)
    params = pack_policy_params(*raw_params)
    x = jax.random.normal(xkey, (batch, state_size), dtype=jnp.float32)

    # Training-mode forward (dropout active, deterministic seed).
    probs = jax.block_until_ready(
        policy_forward(x, params, seed=0, training=True))
    assert probs.shape == (batch, action_size)
    assert bool(jnp.all(probs >= 0.0))
    assert jnp.allclose(jnp.sum(probs, axis=-1), 1.0, atol=1e-5)

    # Eval-mode forward (dropout = identity) through the same kernel.
    probs_eval = jax.block_until_ready(
        policy_forward(x, params, training=False))
    assert probs_eval.shape == (batch, action_size)

    # Pure-JAX reference for eval mode (no dropout) — must match the kernel.
    w1b, w2t, b2 = params
    h_ref = jnp.maximum(x @ w1b[:state_size] + w1b[state_size:], 0.0)
    ref = jax.nn.softmax(h_ref @ w2t.T + b2, axis=-1)
    assert jnp.allclose(probs_eval, ref, atol=1e-5, rtol=1e-5)

    print("KERNEL_OK")
</pallas_src>

<mosaic_0001>
module attributes {stable_mosaic.version = 11 : i64} {
  func.func @policy_kernel(%arg0: i32, %arg1: memref<1xi32, #tpu.memory_space<smem>>, %arg2: memref<128x4xf32, #tpu.memory_space<vmem>>, %arg3: memref<5x128xf32, #tpu.memory_space<vmem>>, %arg4: memref<2x128xf32, #tpu.memory_space<vmem>>, %arg5: memref<1x2xf32, #tpu.memory_space<vmem>>, %arg6: memref<128x2xf32, #tpu.memory_space<vmem>>) attributes {dimension_semantics = [#tpu.dimension_semantics<parallel>], iteration_bounds = array<i64: 2>, scalar_prefetch = 1 : i64, scratch_operands = 0 : i64, tpu.core_type = #tpu.core_type<tc>, window_params = [{transform_indices = @transform_0, window_bounds = array<i64: 128, 4>}, {pipeline_mode = #tpu.pipeline_mode<synchronous>, transform_indices = @transform_1, window_bounds = array<i64: 5, 128>}, {pipeline_mode = #tpu.pipeline_mode<synchronous>, transform_indices = @transform_2, window_bounds = array<i64: 2, 128>}, {pipeline_mode = #tpu.pipeline_mode<synchronous>, transform_indices = @transform_3, window_bounds = array<i64: 1, 2>}, {transform_indices = @transform_4, window_bounds = array<i64: 128, 2>}]} {
    %c0 = arith.constant 0 : index
    %c0_0 = arith.constant 0 : index
    %0 = vector.load %arg3[%c0, %c0_0] : memref<5x128xf32, #tpu.memory_space<vmem>>, vector<5x128xf32>
    %1 = vector.extract_strided_slice %0 {offsets = [0, 0], sizes = [4, 128], strides = [1, 1]} : vector<5x128xf32> to vector<4x128xf32>
    %2 = vector.extract_strided_slice %0 {offsets = [4, 0], sizes = [1, 128], strides = [1, 1]} : vector<5x128xf32> to vector<1x128xf32>
    %c0_1 = arith.constant 0 : index
    %c0_2 = arith.constant 0 : index
    %3 = vector.load %arg2[%c0_1, %c0_2] : memref<128x4xf32, #tpu.memory_space<vmem>>, vector<128x4xf32>
    %cst = arith.constant dense<0.000000e+00> : vector<128x128xf32>
    %4 = tpu.matmul %3, %1, %cst {dimension_numbers = #tpu.dot_dimension_numbers<[1], [0], [0], [1], [0, 0, 1, 1], [], []>} : vector<128x4xf32>, vector<4x128xf32>, vector<128x128xf32> -> vector<128x128xf32>
    %5 = vector.broadcast %2 : vector<1x128xf32> to vector<128x128xf32>
    %6 = arith.addf %4, %5 : vector<128x128xf32>
    %c0_3 = arith.constant 0 : index
    %7 = memref.load %arg1[%c0_3] : memref<1xi32, #tpu.memory_space<smem>>
    %8 = tpu.iota {dimensions = array<i32: 0>} : vector<128x128xi32>
    %9 = tpu.iota {dimensions = array<i32: 1>} : vector<128x128xi32>
    %c128_i32 = arith.constant 128 : i32
    %10 = arith.muli %arg0, %c128_i32 : i32
    %11 = vector.broadcast %10 : i32 to vector<128x128xi32>
    %12 = arith.addi %8, %11 : vector<128x128xi32>
    %c128_i32_4 = arith.constant 128 : i32
    %13 = vector.broadcast %c128_i32_4 : i32 to vector<128x128xi32>
    %14 = arith.muli %12, %13 : vector<128x128xi32>
    %15 = arith.addi %14, %9 : vector<128x128xi32>
    %c-1640531527_i32 = arith.constant -1640531527 : i32
    %16 = arith.muli %7, %c-1640531527_i32 : i32
    %17 = vector.broadcast %16 : i32 to vector<128x128xi32>
    %18 = arith.xori %15, %17 : vector<128x128xi32>
    %c16_i32 = arith.constant 16 : i32
    %19 = vector.broadcast %c16_i32 : i32 to vector<128x128xi32>
    %20 = arith.shrui %18, %19 : vector<128x128xi32>
    %21 = arith.xori %18, %20 : vector<128x128xi32>
    %c-2048144789_i32 = arith.constant -2048144789 : i32
    %22 = vector.broadcast %c-2048144789_i32 : i32 to vector<128x128xi32>
    %23 = arith.muli %21, %22 : vector<128x128xi32>
    %c13_i32 = arith.constant 13 : i32
    %24 = vector.broadcast %c13_i32 : i32 to vector<128x128xi32>
    %25 = arith.shrui %23, %24 : vector<128x128xi32>
    %26 = arith.xori %23, %25 : vector<128x128xi32>
    %c-1028477387_i32 = arith.constant -1028477387 : i32
    %27 = vector.broadcast %c-1028477387_i32 : i32 to vector<128x128xi32>
    %28 = arith.muli %26, %27 : vector<128x128xi32>
    %c16_i32_5 = arith.constant 16 : i32
    %29 = vector.broadcast %c16_i32_5 : i32 to vector<128x128xi32>
    %30 = arith.shrui %28, %29 : vector<128x128xi32>
    %31 = arith.xori %28, %30 : vector<128x128xi32>
    %c-2147483648_i32 = arith.constant -2147483648 : i32
    %32 = vector.broadcast %c-2147483648_i32 : i32 to vector<128x128xi32>
    %33 = arith.cmpi uge, %31, %32 : vector<128x128xi32>
    %cst_6 = arith.constant 2.000000e+00 : f32
    %34 = vector.broadcast %cst_6 : f32 to vector<128x128xf32>
    %35 = arith.mulf %6, %34 : vector<128x128xf32>
    %cst_7 = arith.constant 0.000000e+00 : f32
    %36 = vector.broadcast %cst_7 : f32 to vector<128x128xf32>
    %37 = arith.select %33, %35, %36 : vector<128x128xi1>, vector<128x128xf32>
    %cst_8 = arith.constant 0.000000e+00 : f32
    %38 = vector.broadcast %cst_8 : f32 to vector<128x128xf32>
    %39 = arith.maximumf %37, %38 : vector<128x128xf32>
    %c0_9 = arith.constant 0 : index
    %c0_10 = arith.constant 0 : index
    %40 = vector.load %arg4[%c0_9, %c0_10] : memref<2x128xf32, #tpu.memory_space<vmem>>, vector<2x128xf32>
    %cst_11 = arith.constant dense<0.000000e+00> : vector<128x2xf32>
    %41 = tpu.matmul %39, %40, %cst_11 {dimension_numbers = #tpu.dot_dimension_numbers<[1], [1], [0], [0], [0, 0, 1, 0], [], []>} : vector<128x128xf32>, vector<2x128xf32>, vector<128x2xf32> -> vector<128x2xf32>
    %c0_12 = arith.constant 0 : index
    %c0_13 = arith.constant 0 : index
    %42 = vector.load %arg5[%c0_12, %c0_13] : memref<1x2xf32, #tpu.memory_space<vmem>>, vector<1x2xf32>
    %43 = vector.broadcast %42 : vector<1x2xf32> to vector<128x2xf32>
    %44 = arith.addf %41, %43 : vector<128x2xf32>
    %cst_14 = arith.constant dense<0xFF800000> : vector<128xf32>
    %45 = vector.multi_reduction <maximumf>, %44, %cst_14 [1] : vector<128x2xf32> to vector<128xf32>
    %46 = vector.shape_cast %45 : vector<128xf32> to vector<128x1xf32>
    %47 = vector.broadcast %46 : vector<128x1xf32> to vector<128x2xf32>
    %48 = arith.subf %44, %47 : vector<128x2xf32>
    %49 = math.exp %48 : vector<128x2xf32>
    %cst_15 = arith.constant dense<0.000000e+00> : vector<128xf32>
    %50 = vector.multi_reduction <add>, %49, %cst_15 [1] : vector<128x2xf32> to vector<128xf32>
    %51 = vector.shape_cast %50 : vector<128xf32> to vector<128x1xf32>
    %52 = vector.broadcast %51 : vector<128x1xf32> to vector<128x2xf32>
    %53 = arith.divf %49, %52 : vector<128x2xf32>
    %c0_16 = arith.constant 0 : index
    %c0_17 = arith.constant 0 : index
    %54 = vector.load %arg6[%c0_16, %c0_17] : memref<128x2xf32, #tpu.memory_space<vmem>>, vector<128x2xf32>
    tpu.vector_store %arg6[%c0_16, %c0_17], %53 {strides = array<i32>} : memref<128x2xf32, #tpu.memory_space<vmem>>, vector<128x2xf32>,
    return
  }
  func.func @transform_0(%arg0: i32, %arg1: memref<1xi32, #tpu.memory_space<smem>>) -> (i32, i32) {
    %c0_i32 = arith.constant 0 : i32
    %c0_i32_0 = arith.constant 0 : i32
    return %arg0, %c0_i32 : i32, i32
  }
  func.func @transform_1(%arg0: i32, %arg1: memref<1xi32, #tpu.memory_space<smem>>) -> (i32, i32) {
    %c0_i32 = arith.constant 0 : i32
    %c0_i32_0 = arith.constant 0 : i32
    %c0_i32_1 = arith.constant 0 : i32
    return %c0_i32, %c0_i32_0 : i32, i32
  }
  func.func @transform_2(%arg0: i32, %arg1: memref<1xi32, #tpu.memory_space<smem>>) -> (i32, i32) {
    %c0_i32 = arith.constant 0 : i32
    %c0_i32_0 = arith.constant 0 : i32
    %c0_i32_1 = arith.constant 0 : i32
    return %c0_i32, %c0_i32_0 : i32, i32
  }
  func.func @transform_3(%arg0: i32, %arg1: memref<1xi32, #tpu.memory_space<smem>>) -> (i32, i32) {
    %c0_i32 = arith.constant 0 : i32
    %c0_i32_0 = arith.constant 0 : i32
    %c0_i32_1 = arith.constant 0 : i32
    return %c0_i32, %c0_i32_0 : i32, i32
  }
  func.func @transform_4(%arg0: i32, %arg1: memref<1xi32, #tpu.memory_space<smem>>) -> (i32, i32) {
    %c0_i32 = arith.constant 0 : i32
    %c0_i32_0 = arith.constant 0 : i32
    return %arg0, %c0_i32 : i32, i32
  }
}

</mosaic_0001>

<llo_original>
// kernel: tpu_custom_call.1
$region0: #{tpu_custom_call.1}
  #allocation0 [shape = 'u32[]', space=smem, size = 0x4, offset = 0x4, fixed_abs, tag = 'smem constant byte address 0x4 - core index']
  #allocation1 [shape = 'u32[72,128]{1,0:T(1,128)}', space=vmem, size = 0x9000, scoped, tag = 'internal scratch']
  #allocation2 [shape = 's32[1]{0}', space=sflag, size = 0x4, scoped, tag = 'scoped memory for tpu_custom_call.1']
  #allocation3 [shape = 's32[1]{0:T(128)S(6)}', space=smem, size = 0x200, scoped, tag = 'prefetched SMEM operand 0']
  %s0 = inlined_call_operand.<no memory space> [shape: s32[1], index: 0, kind: input, shape index: {}]
  %s1 = inlined_call_operand.vmem [shape: f32[256,4], index: 1, kind: input, shape index: {}]
  %s2 = inlined_call_operand.vmem [shape: f32[5,128], index: 2, kind: input, shape index: {}]
  %s3 = inlined_call_operand.vmem [shape: f32[2,128], index: 3, kind: input, shape index: {}]
  %s4 = inlined_call_operand.vmem [shape: f32[1,2], index: 4, kind: input, shape index: {}]
  %s5 = inlined_call_operand.vmem [shape: f32[256,2], index: 5, kind: output, shape index: {}]
  %s6 = sld [smem:[#allocation0]]
  $region49: #{tpu_custom_call.1} parent=0
    _
  %s8 = ssub.s32 1, %s6
  %s9 = scalar_select 0, %s8, %s6
  %10 = sst [smem:[#allocation3]] %s0
  loop: start=0, step=1, limit=4
  $region2: #{tpu_custom_call.1} parent=0 // loop_pre_header
    _
  $region3: #{tpu_custom_call.1} parent=0 // loop_header
    %s12 = sphi 0, %s16
    %p13 = scmp.ge.s32.totalorder %s12, 4
    %s22 = sphi 0, %s24
    %s25 = sphi 0, %s22
    %s26 = sphi 0, %s25
    %s42 = sphi 0, %s26
    %s46 = sphi 0, %s46
    %s48 = sphi 0, %s46
    %s49 = sphi 0, %s48
    %s63 = sphi 0, %s49
    %s67 = sphi 0, %s67
    %s69 = sphi 0, %s67
    %s70 = sphi 0, %s69
    %s84 = sphi 0, %s70
    %s88 = sphi 0, %s88
    %s90 = sphi 0, %s88
    %s91 = sphi 0, %s90
    %s105 = sphi 0, %s91
    %s111 = sphi 0, %s113
    %s114 = sphi 0, %s111
    %s115 = sphi 0, %s114
    %s131 = sphi 0, %s115
  $region4: #{tpu_custom_call.1} parent=0 // loop_header_branch
    %15 = sbr.rel (%p13) target = $region8
  $region5: #{tpu_custom_call.1} parent=0 // loop_body
    %s17 = ssub.s32 %s12, 1
    %s18 = ssub.s32 %s12, 2
    %s19 = sadd.s32 %s12, 1
    %s20 = ssub.s32 %s12, %s19
    %p21 = scmp.eq.s32.totalorder %s20, 0
    %s23 = sadd.s32 %s22, 1
    %s24 = scalar_select %p21, %s22, %s23
    %p27 = pneg %p21
    %p28 = scmp.eq.s32.totalorder %s12, 1
    %p29 = por %p27, %p28
    %p30 = scmp.ne.s32.totalorder %s22, %s25
    %p31 = scmp.eq.s32.totalorder %s12, 0
    %p32 = por %p30, %p31
    %p33 = scmp.ne.s32.totalorder %s22, %s25
    %p34 = scmp.eq.s32.totalorder %s17, 1
    %p35 = por %p33, %p34
    %p36 = scmp.ne.s32.totalorder %s25, %s26
    %p37 = scmp.eq.s32.totalorder %s17, 0
    %p38 = por %p36, %p37
    %p39 = scmp.ne.s32.totalorder %s25, %s26
    %p40 = scmp.eq.s32.totalorder %s18, 1
    %p41 = por %p39, %p40
    %p43 = scmp.ne.s32.totalorder %s26, %s42
    %p44 = scmp.eq.s32.totalorder %s18, 0
    %p45 = por %p43, %p44
    %s47 = sadd.s32 %s46, 1
    %p50 = scmp.eq.s32.totalorder %s12, 1
    %p51 = scmp.ne.s32.totalorder %s46, %s48
    %p52 = scmp.eq.s32.totalorder %s12, 0
    %p53 = por %p51, %p52
    %p54 = scmp.ne.s32.totalorder %s46, %s48
    %p55 = scmp.eq.s32.totalorder %s17, 1
    %p56 = por %p54, %p55
    %p57 = scmp.ne.s32.totalorder %s48, %s49
    %p58 = scmp.eq.s32.totalorder %s17, 0
    %p59 = por %p57, %p58
    %p60 = scmp.ne.s32.totalorder %s48, %s49
    %p61 = scmp.eq.s32.totalorder %s18, 1
    %p62 = por %p60, %p61
    %p64 = scmp.ne.s32.totalorder %s49, %s63
    %p65 = scmp.eq.s32.totalorder %s18, 0
    %p66 = por %p64, %p65
    %s68 = sadd.s32 %s67, 1
    %p71 = scmp.eq.s32.totalorder %s12, 1
    %p72 = scmp.ne.s32.totalorder %s67, %s69
    %p73 = scmp.eq.s32.totalorder %s12, 0
    %p74 = por %p72, %p73
    %p75 = scmp.ne.s32.totalorder %s67, %s69
    %p76 = scmp.eq.s32.totalorder %s17, 1
    %p77 = por %p75, %p76
    %p78 = scmp.ne.s32.totalorder %s69, %s70
    %p79 = scmp.eq.s32.totalorder %s17, 0
    %p80 = por %p78, %p79
    %p81 = scmp.ne.s32.totalorder %s69, %s70
    %p82 = scmp.eq.s32.totalorder %s18, 1
    %p83 = por %p81, %p82
    %p85 = scmp.ne.s32.totalorder %s70, %s84
    %p86 = scmp.eq.s32.totalorder %s18, 0
    %p87 = por %p85, %p86
    %s89 = sadd.s32 %s88, 1
    %p92 = scmp.eq.s32.totalorder %s12, 1
    %p93 = scmp.ne.s32.totalorder %s88, %s90
    %p94 = scmp.eq.s32.totalorder %s12, 0
    %p95 = por %p93, %p94
    %p96 = scmp.ne.s32.totalorder %s88, %s90
    %p97 = scmp.eq.s32.totalorder %s17, 1
    %p98 = por %p96, %p97
    %p99 = scmp.ne.s32.totalorder %s90, %s91
    %p100 = scmp.eq.s32.totalorder %s17, 0
    %p101 = por %p99, %p100
    %p102 = scmp.ne.s32.totalorder %s90, %s91
    %p103 = scmp.eq.s32.totalorder %s18, 1
    %p104 = por %p102, %p103
    %p106 = scmp.ne.s32.totalorder %s91, %s105
    %p107 = scmp.eq.s32.totalorder %s18, 0
    %p108 = por %p106, %p107
    %s109 = ssub.s32 %s12, %s19
    %p110 = scmp.eq.s32.totalorder %s109, 0
    %s112 = sadd.s32 %s111, 1
    %s113 = scalar_select %p110, %s111, %s112
    %p116 = pneg %p110
    %p117 = scmp.eq.s32.totalorder %s12, 1
    %p118 = por %p116, %p117
    %p119 = scmp.ne.s32.totalorder %s111, %s114
    %p120 = scmp.eq.s32.totalorder %s12, 0
    %p121 = por %p119, %p120
    %p122 = scmp.ne.s32.totalorder %s111, %s114
    %p123 = scmp.eq.s32.totalorder %s17, 1
    %p124 = por %p122, %p123
    %p125 = scmp.ne.s32.totalorder %s114, %s115
    %p126 = scmp.eq.s32.totalorder %s17, 0
    %p127 = por %p125, %p126
    %p128 = scmp.ne.s32.totalorder %s114, %s115
    %p129 = scmp.eq.s32.totalorder %s18, 1
    %p130 = por %p128, %p129
    %p132 = scmp.ne.s32.totalorder %s115, %s131
    %p133 = scmp.eq.s32.totalorder %s18, 0
    %p134 = por %p132, %p133
    %p135 = scmp.le.s32.totalorder 1, %s12
    %p136 = scmp.lt.s32.totalorder %s12, 3
    %p137 = pnand %p135, %p136
    %p138 = pneg %p137
    // Predicated region
    $region9: #{tpu_custom_call.1} parent=5 // pred_check
      _
    $region10: #{tpu_custom_call.1} parent=5 // pred_check_branch
      %140 = sbr.rel (%p137) target = $region12
    $region11: #{tpu_custom_call.1} parent=5 // pred_region
      %s141 = ssub.s32 %s12, 1
      // Predicated region
      $region13: #{tpu_custom_call.1} parent=11 // pred_check
        %p142 = pneg %p59
      $region14: #{tpu_custom_call.1} parent=11 // pred_check_branch
        %144 = sbr.rel (%p142) target = $region16
      $region15: #{tpu_custom_call.1} parent=11 // pred_region
        _
      $region16: #{tpu_custom_call.1} parent=11 // pred_fallthru
        _
      // Predicated region
      $region17: #{tpu_custom_call.1} parent=11 // pred_check
        %p145 = pneg %p80
      $region18: #{tpu_custom_call.1} parent=11 // pred_check_branch
        %147 = sbr.rel (%p145) target = $region20
      $region19: #{tpu_custom_call.1} parent=11 // pred_region
        _
      $region20: #{tpu_custom_call.1} parent=11 // pred_fallthru
        _
      // Predicated region
      $region21: #{tpu_custom_call.1} parent=11 // pred_check
        %p148 = pneg %p101
      $region22: #{tpu_custom_call.1} parent=11 // pred_check_branch
        %150 = sbr.rel (%p148) target = $region24
      $region23: #{tpu_custom_call.1} parent=11 // pred_region
        _
      $region24: #{tpu_custom_call.1} parent=11 // pred_fallthru
        _
    $region12: #{tpu_custom_call.1} parent=5 // pred_fallthru
      _
    %p151 = scmp.lt.s32.totalorder %s12, 2
    // Predicated region
    $region25: #{tpu_custom_call.1} parent=5 // pred_check
      %p152 = pneg %p151
    $region26: #{tpu_custom_call.1} parent=5 // pred_check_branch
      %154 = sbr.rel (%p152) target = $region28
    $region27: #{tpu_custom_call.1} parent=5 // pred_region
      // Predicated region
      $region29: #{tpu_custom_call.1} parent=27 // pred_check
        %p155 = pneg %p32
      $region30: #{tpu_custom_call.1} parent=27 // pred_check_branch
        %157 = sbr.rel (%p155) target = $region32
      $region31: #{tpu_custom_call.1} parent=27 // pred_region
        %s158 = smul.u32 16, %s12
        %p159 = scmp.lt.s32.totalorder %s158, 31
        %s160 = scalar_select %p159, %s158, 31
        %s161 = smul.addr %s160, 8
        %s162 = scalar_lea.vmem %s1, %s161
        %s163 = smul.u32 16, %s12
      $region32: #{tpu_custom_call.1} parent=27 // pred_fallthru
        _
    $region28: #{tpu_custom_call.1} parent=5 // pred_fallthru
      _
    %p164 = scmp.le.s32.totalorder 1, %s12
    %p165 = scmp.lt.s32.totalorder %s12, 3
    %p166 = pnand %p164, %p165
    %p167 = pneg %p166
    // Predicated region
    $region33: #{tpu_custom_call.1} parent=5 // pred_check
      _
    $region34: #{tpu_custom_call.1} parent=5 // pred_check_branch
      %169 = sbr.rel (%p166) target = $region36
    $region35: #{tpu_custom_call.1} parent=5 // pred_region
      %s170 = ssub.s32 %s12, 1
      %s171 = smul.u32 16, %s17
      %p172 = scmp.lt.s32.totalorder %s171, 31
      %s173 = scalar_select %p172, %s171, 31
      %s174 = smul.addr %s173, 8
      %s175 = scalar_lea.vmem %s1, %s174
      %p176 = pneg %p38
      %p177 = pneg %p35
      %p178 = pneg %p59
      %p179 = pneg %p56
      %p180 = pneg %p80
      %p181 = pneg %p77
      %p182 = pneg %p101
      %p183 = pneg %p98
      %p184 = pneg %p127
      %p185 = pneg %p124
      %s186 = smul.u32 16, %s17
      %p187 = scmp.lt.s32.totalorder %s186, 31
      %s188 = scalar_select %p187, %s186, 31
      %s189 = smul.addr %s188, 8
      %s190 = scalar_lea.vmem %s5, %s189
      %s191 = smul.u32 16, %s17
      %p192 = scmp.lt.s32.totalorder %s191, 31
      %s193 = scalar_select %p192, %s191, 31
      %s194 = smul.addr %s193, 8
      %s195 = scalar_lea.vmem %s1, %s194
      %s196 = smul.u32 16, %s17
      %s197 = smul.u32 16, %s17
      %p198 = scmp.lt.s32.totalorder %s197, 31
      %s199 = scalar_select %p198, %s197, 31
      %s200 = smul.addr %s199, 8
      %s201 = scalar_lea.vmem %s5, %s200
      %s202 = smul.u32 16, %s17
      %v203 = vld [vmem:[%s2] sm:$0x1f]
      %v204 = vld [vmem:[%s195] sm:$0xff]
      %v205 = vld [vmem:[%s195 + $0x8] sm:$0xff]
      %v206 = vld [vmem:[%s195 + $0x10] sm:$0xff]
      %v207 = vld [vmem:[%s195 + $0x18] sm:$0xff]
      %v208 = vld [vmem:[%s195 + $0x20] sm:$0xff]
      %v209 = vld [vmem:[%s195 + $0x28] sm:$0xff]
      %v210 = vld [vmem:[%s195 + $0x30] sm:$0xff]
      %v211 = vld [vmem:[%s195 + $0x38] sm:$0xff]
      %v212 = vld [vmem:[%s195 + $0x40] sm:$0xff]
      %v213 = vld [vmem:[%s195 + $0x48] sm:$0xff]
      %v214 = vld [vmem:[%s195 + $0x50] sm:$0xff]
      %v215 = vld [vmem:[%s195 + $0x58] sm:$0xff]
      %v216 = vld [vmem:[%s195 + $0x60] sm:$0xff]
      %v217 = vld [vmem:[%s195 + $0x68] sm:$0xff]
      %v218 = vld [vmem:[%s195 + $0x70] sm:$0xff]
      %v219 = vld [vmem:[%s195 + $0x78] sm:$0xff]
      %v220 = vperm.slane %v203, 4
      %vm221 = vcmask 31744
      %v223 = vsel %vm221, %v204, 0
      %v226 = vsel %vm221, %v205, 0
      %v229 = vsel %vm221, %v206, 0
      %v232 = vsel %vm221, %v207, 0
      %v235 = vsel %vm221, %v208, 0
      %v238 = vsel %vm221, %v209, 0
      %v241 = vsel %vm221, %v210, 0
      %v244 = vsel %vm221, %v211, 0
      %v247 = vsel %vm221, %v212, 0
      %v250 = vsel %vm221, %v213, 0
      %v253 = vsel %vm221, %v214, 0
      %v256 = vsel %vm221, %v215, 0
      %v259 = vsel %vm221, %v216, 0
      %v262 = vsel %vm221, %v217, 0
      %v265 = vsel %vm221, %v218, 0
      %v268 = vsel %vm221, %v219, 0
      %vm270 = vcmask 1043456
      %v272 = vsel %vm270, %v203, 0
      %274 = vmatpush.msra.mxu0 0.0
      %275 = vmatpush.msra.mxu0 0.0
      %276 = vmatpush.msra.mxu0 0.0
      %277 = vmatpush.msra.mxu0 0.0
      %278 = vmatpush.msra.mxu0 0.0
      %279 = vmatpush.msra.mxu0 0.0
      %280 = vmatpush.msra.mxu0 0.0
      %281 = vmatpush.msra.mxu0 0.0
      %282 = vmatpush.msra.mxu0 0.0
      %283 = vmatpush.msra.mxu0 0.0
      %284 = vmatpush.msra.mxu0 0.0
      %285 = vmatpush.msra.mxu0 0.0
      %286 = vmatpush.msra.mxu0 0.0
      %287 = vmatpush.msra.mxu0 0.0
      %288 = vmatpush.msra.mxu0 0.0
      %289 = vmatpush.msra.mxu0 %v272
      %290 = vmatmul.f32.gmra.mxu0 %v223
      %v291 = vpop.f32.mrf.mxu0
      %v292 = vadd.f32 %v220, %v291
      %293 = vmatmul.f32.gmra.mxu0 %v226
      %v294 = vpop.f32.mrf.mxu0
      %v295 = vadd.f32 %v220, %v294
      %296 = vmatmul.f32.gmra.mxu0 %v229
      %v297 = vpop.f32.mrf.mxu0
      %v298 = vadd.f32 %v220, %v297
      %299 = vmatmul.f32.gmra.mxu0 %v232
      %v300 = vpop.f32.mrf.mxu0
      %v301 = vadd.f32 %v220, %v300
      %302 = vmatmul.f32.gmra.mxu0 %v235
      %v303 = vpop.f32.mrf.mxu0
      %v304 = vadd.f32 %v220, %v303
      %305 = vmatmul.f32.gmra.mxu0 %v238
      %v306 = vpop.f32.mrf.mxu0
      %v307 = vadd.f32 %v220, %v306
      %308 = vmatmul.f32.gmra.mxu0 %v241
      %v309 = vpop.f32.mrf.mxu0
      %v310 = vadd.f32 %v220, %v309
      %311 = vmatmul.f32.gmra.mxu0 %v244
      %v312 = vpop.f32.mrf.mxu0
      %v313 = vadd.f32 %v220, %v312
      %314 = vmatmul.f32.gmra.mxu0 %v247
      %v315 = vpop.f32.mrf.mxu0
      %v316 = vadd.f32 %v220, %v315
      %317 = vmatmul.f32.gmra.mxu0 %v250
      %v318 = vpop.f32.mrf.mxu0
      %v319 = vadd.f32 %v220, %v318
      %320 = vmatmul.f32.gmra.mxu0 %v253
      %v321 = vpop.f32.mrf.mxu0
      %v322 = vadd.f32 %v220, %v321
      %323 = vmatmul.f32.gmra.mxu0 %v256
      %v324 = vpop.f32.mrf.mxu0
      %v325 = vadd.f32 %v220, %v324
      %326 = vmatmul.f32.gmra.mxu0 %v259
      %v327 = vpop.f32.mrf.mxu0
      %v328 = vadd.f32 %v220, %v327
      %329 = vmatmul.f32.gmra.mxu0 %v262
      %v330 = vpop.f32.mrf.mxu0
      %v331 = vadd.f32 %v220, %v330
      %332 = vmatmul.f32.gmra.mxu0 %v265
      %v333 = vpop.f32.mrf.mxu0
      %v334 = vadd.f32 %v220, %v333
      %335 = vmatmul.f32.gmra.mxu0 %v268
      %v336 = vpop.f32.mrf.mxu0
      %v337 = vadd.f32 %v220, %v336
      %338 = vdwg.mxu0
      %s339 = sld [smem:[#allocation3]]
      %v340 = vlaneseq
      %v341 = vshrl.u32 %v340, 7
      %v342 = vadd.s32 %v341, 8
      %v343 = vadd.s32 %v341, 16
      %v344 = vadd.s32 %v341, 24
      %v345 = vadd.s32 %v341, 32
      %v346 = vadd.s32 %v341, 40
      %v347 = vadd.s32 %v341, 48
      %v348 = vadd.s32 %v341, 56
      %v349 = vadd.s32 %v341, 64
      %v350 = vadd.s32 %v341, 72
      %v351 = vadd.s32 %v341, 80
      %v352 = vadd.s32 %v341, 88
      %v353 = vadd.s32 %v341, 96
      %v354 = vadd.s32 %v341, 104
      %v355 = vadd.s32 %v341, 112
      %v356 = vadd.s32 %v341, 120
      %v357 = vlaneseq
      %v358 = vand.u32 %v357, 127
      %s359 = smul.u32 %s17, 128
      %v360 = vstv %s359
      %v361 = vadd.s32 %v341, %v360
      %v362 = vadd.s32 %v342, %v360
      %v363 = vadd.s32 %v343, %v360
      %v364 = vadd.s32 %v344, %v360
      %v365 = vadd.s32 %v345, %v360
      %v366 = vadd.s32 %v346, %v360
      %v367 = vadd.s32 %v347, %v360
      %v368 = vadd.s32 %v348, %v360
      %v369 = vadd.s32 %v349, %v360
      %v370 = vadd.s32 %v350, %v360
      %v371 = vadd.s32 %v351, %v360
      %v372 = vadd.s32 %v352, %v360
      %v373 = vadd.s32 %v353, %v360
      %v374 = vadd.s32 %v354, %v360
      %v375 = vadd.s32 %v355, %v360
      %v376 = vadd.s32 %v356, %v360
      %v377 = vmul.u32 %v361, 128
      %v378 = vmul.u32 %v362, 128
      %v379 = vmul.u32 %v363, 128
      %v380 = vmul.u32 %v364, 128
      %v381 = vmul.u32 %v365, 128
      %v382 = vmul.u32 %v366, 128
      %v383 = vmul.u32 %v367, 128
      %v384 = vmul.u32 %v368, 128
      %v385 = vmul.u32 %v369, 128
      %v386 = vmul.u32 %v370, 128
      %v387 = vmul.u32 %v371, 128
      %v388 = vmul.u32 %v372, 128
      %v389 = vmul.u32 %v373, 128
      %v390 = vmul.u32 %v374, 128
      %v391 = vmul.u32 %v375, 128
      %v392 = vmul.u32 %v376, 128
      %v393 = vadd.s32 %v377, %v358
      %v394 = vadd.s32 %v378, %v358
      %v395 = vadd.s32 %v379, %v358
      %v396 = vadd.s32 %v380, %v358
      %v397 = vadd.s32 %v381, %v358
      %v398 = vadd.s32 %v382, %v358
      %v399 = vadd.s32 %v383, %v358
      %v400 = vadd.s32 %v384, %v358
      %v401 = vadd.s32 %v385, %v358
      %v402 = vadd.s32 %v386, %v358
      %v403 = vadd.s32 %v387, %v358
      %v404 = vadd.s32 %v388, %v358
      %v405 = vadd.s32 %v389, %v358
      %v406 = vadd.s32 %v390, %v358
      %v407 = vadd.s32 %v391, %v358
      %v408 = vadd.s32 %v392, %v358
      %s409 = smul.u32 %s339, 2654435769
      %v410 = vstv %s409
      %v411 = vxor.u32 %v393, %v410
      %v412 = vxor.u32 %v394, %v410
      %v413 = vxor.u32 %v395, %v410
      %v414 = vxor.u32 %v396, %v410
      %v415 = vxor.u32 %v397, %v410
      %v416 = vxor.u32 %v398, %v410
      %v417 = vxor.u32 %v399, %v410
      %v418 = vxor.u32 %v400, %v410
      %v419 = vxor.u32 %v401, %v410
      %v420 = vxor.u32 %v402, %v410
      %v421 = vxor.u32 %v403, %v410
      %v422 = vxor.u32 %v404, %v410
      %v423 = vxor.u32 %v405, %v410
      %v424 = vxor.u32 %v406, %v410
      %v425 = vxor.u32 %v407, %v410
      %v426 = vxor.u32 %v408, %v410
      %v427 = vshrl.u32 %v411, 16
      %v428 = vshrl.u32 %v412, 16
      %v429 = vshrl.u32 %v413, 16
      %v430 = vshrl.u32 %v414, 16
      %v431 = vshrl.u32 %v415, 16
      %v432 = vshrl.u32 %v416, 16
      %v433 = vshrl.u32 %v417, 16
      %v434 = vshrl.u32 %v418, 16
      %v435 = vshrl.u32 %v419, 16
      %v436 = vshrl.u32 %v420, 16
      %v437 = vshrl.u32 %v421, 16
      %v438 = vshrl.u32 %v422, 16
      %v439 = vshrl.u32 %v423, 16
      %v440 = vshrl.u32 %v424, 16
      %v441 = vshrl.u32 %v425, 16
      %v442 = vshrl.u32 %v426, 16
      %v443 = vxor.u32 %v411, %v427
      %v444 = vxor.u32 %v412, %v428
      %v445 = vxor.u32 %v413, %v429
      %v446 = vxor.u32 %v414, %v430
      %v447 = vxor.u32 %v415, %v431
      %v448 = vxor.u32 %v416, %v432
      %v449 = vxor.u32 %v417, %v433
      %v450 = vxor.u32 %v418, %v434
      %v451 = vxor.u32 %v419, %v435
      %v452 = vxor.u32 %v420, %v436
      %v453 = vxor.u32 %v421, %v437
      %v454 = vxor.u32 %v422, %v438
      %v455 = vxor.u32 %v423, %v439
      %v456 = vxor.u32 %v424, %v440
      %v457 = vxor.u32 %v425, %v441
      %v458 = vxor.u32 %v426, %v442
      %v459 = vmul.u32 %v443, 2246822507
      %v460 = vmul.u32 %v444, 2246822507
      %v461 = vmul.u32 %v445, 2246822507
      %v462 = vmul.u32 %v446, 2246822507
      %v463 = vmul.u32 %v447, 2246822507
      %v464 = vmul.u32 %v448, 2246822507
      %v465 = vmul.u32 %v449, 2246822507
      %v466 = vmul.u32 %v450, 2246822507
      %v467 = vmul.u32 %v451, 2246822507
      %v468 = vmul.u32 %v452, 2246822507
      %v469 = vmul.u32 %v453, 2246822507
      %v470 = vmul.u32 %v454, 2246822507
      %v471 = vmul.u32 %v455, 2246822507
      %v472 = vmul.u32 %v456, 2246822507
      %v473 = vmul.u32 %v457, 2246822507
      %v474 = vmul.u32 %v458, 2246822507
      %v475 = vshrl.u32 %v459, 13
      %v476 = vshrl.u32 %v460, 13
      %v477 = vshrl.u32 %v461, 13
      %v478 = vshrl.u32 %v462, 13
      %v479 = vshrl.u32 %v463, 13
      %v480 = vshrl.u32 %v464, 13
      %v481 = vshrl.u32 %v465, 13
      %v482 = vshrl.u32 %v466, 13
      %v483 = vshrl.u32 %v467, 13
      %v484 = vshrl.u32 %v468, 13
      %v485 = vshrl.u32 %v469, 13
      %v486 = vshrl.u32 %v470, 13
      %v487 = vshrl.u32 %v471, 13
      %v488 = vshrl.u32 %v472, 13
      %v489 = vshrl.u32 %v473, 13
      %v490 = vshrl.u32 %v474, 13
      %v491 = vxor.u32 %v459, %v475
      %v492 = vxor.u32 %v460, %v476
      %v493 = vxor.u32 %v461, %v477
      %v494 = vxor.u32 %v462, %v478
      %v495 = vxor.u32 %v463, %v479
      %v496 = vxor.u32 %v464, %v480
      %v497 = vxor.u32 %v465, %v481
      %v498 = vxor.u32 %v466, %v482
      %v499 = vxor.u32 %v467, %v483
      %v500 = vxor.u32 %v468, %v484
      %v501 = vxor.u32 %v469, %v485
      %v502 = vxor.u32 %v470, %v486
      %v503 = vxor.u32 %v471, %v487
      %v504 = vxor.u32 %v472, %v488
      %v505 = vxor.u32 %v473, %v489
      %v506 = vxor.u32 %v474, %v490
      %v507 = vmul.u32 %v491, 3266489909
      %v508 = vmul.u32 %v492, 3266489909
      %v509 = vmul.u32 %v493, 3266489909
      %v510 = vmul.u32 %v494, 3266489909
      %v511 = vmul.u32 %v495, 3266489909
      %v512 = vmul.u32 %v496, 3266489909
      %v513 = vmul.u32 %v497, 3266489909
      %v514 = vmul.u32 %v498, 3266489909
      %v515 = vmul.u32 %v499, 3266489909
      %v516 = vmul.u32 %v500, 3266489909
      %v517 = vmul.u32 %v501, 3266489909
      %v518 = vmul.u32 %v502, 3266489909
      %v519 = vmul.u32 %v503, 3266489909
      %v520 = vmul.u32 %v504, 3266489909
      %v521 = vmul.u32 %v505, 3266489909
      %v522 = vmul.u32 %v506, 3266489909
      %v523 = vshrl.u32 %v507, 16
      %v524 = vshrl.u32 %v508, 16
      %v525 = vshrl.u32 %v509, 16
      %v526 = vshrl.u32 %v510, 16
      %v527 = vshrl.u32 %v511, 16
      %v528 = vshrl.u32 %v512, 16
      %v529 = vshrl.u32 %v513, 16
      %v530 = vshrl.u32 %v514, 16
      %v531 = vshrl.u32 %v515, 16
      %v532 = vshrl.u32 %v516, 16
      %v533 = vshrl.u32 %v517, 16
      %v534 = vshrl.u32 %v518, 16
      %v535 = vshrl.u32 %v519, 16
      %v536 = vshrl.u32 %v520, 16
      %v537 = vshrl.u32 %v521, 16
      %v538 = vshrl.u32 %v522, 16
      %v539 = vxor.u32 %v507, %v523
      %v540 = vxor.u32 %v508, %v524
      %v541 = vxor.u32 %v509, %v525
      %v542 = vxor.u32 %v510, %v526
      %v543 = vxor.u32 %v511, %v527
      %v544 = vxor.u32 %v512, %v528
      %v545 = vxor.u32 %v513, %v529
      %v546 = vxor.u32 %v514, %v530
      %v547 = vxor.u32 %v515, %v531
      %v548 = vxor.u32 %v516, %v532
      %v549 = vxor.u32 %v517, %v533
      %v550 = vxor.u32 %v518, %v534
      %v551 = vxor.u32 %v519, %v535
      %v552 = vxor.u32 %v520, %v536
      %v553 = vxor.u32 %v521, %v537
      %v554 = vxor.u32 %v522, %v538
      %v555 = vadd.s32 %v539, 2147483648
      %vm557 = vcmp.ge.s32.totalorder %v555, 0
      %v558 = vadd.s32 %v540, 2147483648
      %vm560 = vcmp.ge.s32.totalorder %v558, 0
      %v561 = vadd.s32 %v541, 2147483648
      %vm563 = vcmp.ge.s32.totalorder %v561, 0
      %v564 = vadd.s32 %v542, 2147483648
      %vm566 = vcmp.ge.s32.totalorder %v564, 0
      %v567 = vadd.s32 %v543, 2147483648
      %vm569 = vcmp.ge.s32.totalorder %v567, 0
      %v570 = vadd.s32 %v544, 2147483648
      %vm572 = vcmp.ge.s32.totalorder %v570, 0
      %v573 = vadd.s32 %v545, 2147483648
      %vm575 = vcmp.ge.s32.totalorder %v573, 0
      %v576 = vadd.s32 %v546, 2147483648
      %vm578 = vcmp.ge.s32.totalorder %v576, 0
      %v579 = vadd.s32 %v547, 2147483648
      %vm581 = vcmp.ge.s32.totalorder %v579, 0
      %v582 = vadd.s32 %v548, 2147483648
      %vm584 = vcmp.ge.s32.totalorder %v582, 0
      %v585 = vadd.s32 %v549, 2147483648
      %vm587 = vcmp.ge.s32.totalorder %v585, 0
      %v588 = vadd.s32 %v550, 2147483648
      %vm590 = vcmp.ge.s32.totalorder %v588, 0
      %v591 = vadd.s32 %v551, 2147483648
      %vm593 = vcmp.ge.s32.totalorder %v591, 0
      %v594 = vadd.s32 %v552, 2147483648
      %vm596 = vcmp.ge.s32.totalorder %v594, 0
      %v597 = vadd.s32 %v553, 2147483648
      %vm599 = vcmp.ge.s32.totalorder %v597, 0
      %v600 = vadd.s32 %v554, 2147483648
      %vm602 = vcmp.ge.s32.totalorder %v600, 0
      %v603 = vmul.f32 %v292, 2.0
      %v604 = vmul.f32 %v295, 2.0
      %v605 = vmul.f32 %v298, 2.0
      %v606 = vmul.f32 %v301, 2.0
      %v607 = vmul.f32 %v304, 2.0
      %v608 = vmul.f32 %v307, 2.0
      %v609 = vmul.f32 %v310, 2.0
      %v610 = vmul.f32 %v313, 2.0
      %v611 = vmul.f32 %v316, 2.0
      %v612 = vmul.f32 %v319, 2.0
      %v613 = vmul.f32 %v322, 2.0
      %v614 = vmul.f32 %v325, 2.0
      %v615 = vmul.f32 %v328, 2.0
      %v616 = vmul.f32 %v331, 2.0
      %v617 = vmul.f32 %v334, 2.0
      %v618 = vmul.f32 %v337, 2.0
      %v619 = vsel %vm557, %v603, 0.0
      %v620 = vsel %vm560, %v604, 0.0
      %v621 = vsel %vm563, %v605, 0.0
      %v622 = vsel %vm566, %v606, 0.0
      %v623 = vsel %vm569, %v607, 0.0
      %v624 = vsel %vm572, %v608, 0.0
      %v625 = vsel %vm575, %v609, 0.0
      %v626 = vsel %vm578, %v610, 0.0
      %v627 = vsel %vm581, %v611, 0.0
      %v628 = vsel %vm584, %v612, 0.0
      %v629 = vsel %vm587, %v613, 0.0
      %v630 = vsel %vm590, %v614, 0.0
      %v631 = vsel %vm593, %v615, 0.0
      %v632 = vsel %vm596, %v616, 0.0
      %v633 = vsel %vm599, %v617, 0.0
      %v634 = vsel %vm602, %v618, 0.0
      %v635 = vmax.f32 %v619, 0.0
      %v636 = vmax.f32 %v620, 0.0
      %v637 = vmax.f32 %v621, 0.0
      %v638 = vmax.f32 %v622, 0.0
      %v639 = vmax.f32 %v623, 0.0
      %v640 = vmax.f32 %v624, 0.0
      %v641 = vmax.f32 %v625, 0.0
      %v642 = vmax.f32 %v626, 0.0
      %v643 = vmax.f32 %v627, 0.0
      %v644 = vmax.f32 %v628, 0.0
      %v645 = vmax.f32 %v629, 0.0
      %v646 = vmax.f32 %v630, 0.0
      %v647 = vmax.f32 %v631, 0.0
      %v648 = vmax.f32 %v632, 0.0
      %v649 = vmax.f32 %v633, 0.0
      %v650 = vmax.f32 %v634, 0.0
      %v651 = vld [vmem:[%s3] sm:$0x3]
      %v652 = vld [vmem:[%s4] sm:$0x1]
      %v654 = vperm.slane %v652, 0
      %656 = vmatpush.xpose.msra.mxu0 0.0
      %657 = vmatpush.xpose.msra.mxu0 0.0
      %658 = vmatpush.xpose.msra.mxu0 0.0
      %659 = vmatpush.xpose.msra.mxu0 0.0
      %660 = vmatpush.xpose.msra.mxu0 0.0
      %661 = vmatpush.xpose.msra.mxu0 0.0
      %662 = vmatpush.xpose.msra.mxu0 0.0
      %663 = vmatpush.xpose.msra.mxu0 0.0
      %664 = vmatpush.xpose.msra.mxu0 0.0
      %665 = vmatpush.xpose.msra.mxu0 0.0
      %666 = vmatpush.xpose.msra.mxu0 0.0
      %667 = vmatpush.xpose.msra.mxu0 0.0
      %668 = vmatpush.xpose.msra.mxu0 0.0
      %669 = vmatpush.xpose.msra.mxu0 0.0
      %670 = vmatpush.xpose.msra.mxu0 0.0
      %671 = vmatpush.xpose.msra.mxu0 %v651
      %672 = vmatmul.f32.gmra.mxu0 %v635
      %v673 = vpop.f32.mrf.mxu0
      %v674 = vadd.f32 %v654, %v673
      %675 = vmatmul.f32.gmra.mxu0 %v636
      %v676 = vpop.f32.mrf.mxu0
      %v677 = vadd.f32 %v654, %v676
      %678 = vmatmul.f32.gmra.mxu0 %v637
      %v679 = vpop.f32.mrf.mxu0
      %v680 = vadd.f32 %v654, %v679
      %681 = vmatmul.f32.gmra.mxu0 %v638
      %v682 = vpop.f32.mrf.mxu0
      %v683 = vadd.f32 %v654, %v682
      %684 = vmatmul.f32.gmra.mxu0 %v639
      %v685 = vpop.f32.mrf.mxu0
      %v686 = vadd.f32 %v654, %v685
      %687 = vmatmul.f32.gmra.mxu0 %v640
      %v688 = vpop.f32.mrf.mxu0
      %v689 = vadd.f32 %v654, %v688
      %690 = vmatmul.f32.gmra.mxu0 %v641
      %v691 = vpop.f32.mrf.mxu0
      %v692 = vadd.f32 %v654, %v691
      %693 = vmatmul.f32.gmra.mxu0 %v642
      %v694 = vpop.f32.mrf.mxu0
      %v695 = vadd.f32 %v654, %v694
      %696 = vmatmul.f32.gmra.mxu0 %v643
      %v697 = vpop.f32.mrf.mxu0
      %v698 = vadd.f32 %v654, %v697
      %699 = vmatmul.f32.gmra.mxu0 %v644
      %v700 = vpop.f32.mrf.mxu0
      %v701 = vadd.f32 %v654, %v700
      %702 = vmatmul.f32.gmra.mxu0 %v645
      %v703 = vpop.f32.mrf.mxu0
      %v704 = vadd.f32 %v654, %v703
      %705 = vmatmul.f32.gmra.mxu0 %v646
      %v706 = vpop.f32.mrf.mxu0
      %v707 = vadd.f32 %v654, %v706
      %708 = vmatmul.f32.gmra.mxu0 %v647
      %v709 = vpop.f32.mrf.mxu0
      %v710 = vadd.f32 %v654, %v709
      %711 = vmatmul.f32.gmra.mxu0 %v648
      %v712 = vpop.f32.mrf.mxu0
      %v713 = vadd.f32 %v654, %v712
      %714 = vmatmul.f32.gmra.mxu0 %v649
      %v715 = vpop.f32.mrf.mxu0
      %v716 = vadd.f32 %v654, %v715
      %717 = vmatmul.f32.gmra.mxu0 %v650
      %v718 = vpop.f32.mrf.mxu0
      %v719 = vadd.f32 %v654, %v718
      %720 = vdwg.mxu0
      %vm721 = vcmask 15360
      %v722 = vsel %vm721, %v674, -inf
      %723 = vmax.xlane.f32.xlu0 %v722
      %v724 = vpop.xlane.xlu0 %723
      %v725 = vsel %vm721, %v677, -inf
      %726 = vmax.xlane.f32.xlu0 %v725
      %v727 = vpop.xlane.xlu0 %726
      %v728 = vsel %vm721, %v680, -inf
      %729 = vmax.xlane.f32.xlu0 %v728
      %v730 = vpop.xlane.xlu0 %729
      %v731 = vsel %vm721, %v683, -inf
      %732 = vmax.xlane.f32.xlu0 %v731
      %v733 = vpop.xlane.xlu0 %732
      %v734 = vsel %vm721, %v686, -inf
      %735 = vmax.xlane.f32.xlu0 %v734
      %v736 = vpop.xlane.xlu0 %735
      %v737 = vsel %vm721, %v689, -inf
      %738 = vmax.xlane.f32.xlu0 %v737
      %v739 = vpop.xlane.xlu0 %738
      %v740 = vsel %vm721, %v692, -inf
      %741 = vmax.xlane.f32.xlu0 %v740
      %v742 = vpop.xlane.xlu0 %741
      %v743 = vsel %vm721, %v695, -inf
      %744 = vmax.xlane.f32.xlu0 %v743
      %v745 = vpop.xlane.xlu0 %744
      %v746 = vsel %vm721, %v698, -inf
      %747 = vmax.xlane.f32.xlu0 %v746
      %v748 = vpop.xlane.xlu0 %747
      %v749 = vsel %vm721, %v701, -inf
      %750 = vmax.xlane.f32.xlu0 %v749
      %v751 = vpop.xlane.xlu0 %750
      %v752 = vsel %vm721, %v704, -inf
      %753 = vmax.xlane.f32.xlu0 %v752
      %v754 = vpop.xlane.xlu0 %753
      %v755 = vsel %vm721, %v707, -inf
      %756 = vmax.xlane.f32.xlu0 %v755
      %v757 = vpop.xlane.xlu0 %756
      %v758 = vsel %vm721, %v710, -inf
      %759 = vmax.xlane.f32.xlu0 %v758
      %v760 = vpop.xlane.xlu0 %759
      %v761 = vsel %vm721, %v713, -inf
      %762 = vmax.xlane.f32.xlu0 %v761
      %v763 = vpop.xlane.xlu0 %762
      %v764 = vsel %vm721, %v716, -inf
      %765 = vmax.xlane.f32.xlu0 %v764
      %v766 = vpop.xlane.xlu0 %765
      %v767 = vsel %vm721, %v719, -inf
      %768 = vmax.xlane.f32.xlu0 %v767
      %v769 = vpop.xlane.xlu0 %768
      %v770 = vsub.f32 %v674, %v724
      %v771 = vsub.f32 %v677, %v727
      %v772 = vsub.f32 %v680, %v730
      %v773 = vsub.f32 %v683, %v733
      %v774 = vsub.f32 %v686, %v736
      %v775 = vsub.f32 %v689, %v739
      %v776 = vsub.f32 %v692, %v742
      %v777 = vsub.f32 %v695, %v745
      %v778 = vsub.f32 %v698, %v748
      %v779 = vsub.f32 %v701, %v751
      %v780 = vsub.f32 %v704, %v754
      %v781 = vsub.f32 %v707, %v757
      %v782 = vsub.f32 %v710, %v760
      %v783 = vsub.f32 %v713, %v763
      %v784 = vsub.f32 %v716, %v766
      %v785 = vsub.f32 %v719, %v769
      %v786 = vmul.f32 %v770, 1.442695
      %v787 = vpow.pop %v786
      %v788 = vmul.f32 %v771, 1.442695
      %v789 = vpow.pop %v788
      %v790 = vmul.f32 %v772, 1.442695
      %v791 = vpow.pop %v790
      %v792 = vmul.f32 %v773, 1.442695
      %v793 = vpow.pop %v792
      %v794 = vmul.f32 %v774, 1.442695
      %v795 = vpow.pop %v794
      %v796 = vmul.f32 %v775, 1.442695
      %v797 = vpow.pop %v796
      %v798 = vmul.f32 %v776, 1.442695
      %v799 = vpow.pop %v798
      %v800 = vmul.f32 %v777, 1.442695
      %v801 = vpow.pop %v800
      %v802 = vmul.f32 %v778, 1.442695
      %v803 = vpow.pop %v802
      %v804 = vmul.f32 %v779, 1.442695
      %v805 = vpow.pop %v804
      %v806 = vmul.f32 %v780, 1.442695
      %v807 = vpow.pop %v806
      %v808 = vmul.f32 %v781, 1.442695
      %v809 = vpow.pop %v808
      %v810 = vmul.f32 %v782, 1.442695
      %v811 = vpow.pop %v810
      %v812 = vmul.f32 %v783, 1.442695
      %v813 = vpow.pop %v812
      %v814 = vmul.f32 %v784, 1.442695
      %v815 = vpow.pop %v814
      %v816 = vmul.f32 %v785, 1.442695
      %v817 = vpow.pop %v816
      %v818 = vsel %vm721, %v787, 0.0
      %819 = vadd.xlane.f32.xlu0 %v818
      %v820 = vpop.xlane.xlu0 %819
      %v821 = vsel %vm721, %v789, 0.0
      %822 = vadd.xlane.f32.xlu0 %v821
      %v823 = vpop.xlane.xlu0 %822
      %v824 = vsel %vm721, %v791, 0.0
      %825 = vadd.xlane.f32.xlu0 %v824
      %v826 = vpop.xlane.xlu0 %825
      %v827 = vsel %vm721, %v793, 0.0
      %828 = vadd.xlane.f32.xlu0 %v827
      %v829 = vpop.xlane.xlu0 %828
      %v830 = vsel %vm721, %v795, 0.0
      %831 = vadd.xlane.f32.xlu0 %v830
      %v832 = vpop.xlane.xlu0 %831
      %v833 = vsel %vm721, %v797, 0.0
      %834 = vadd.xlane.f32.xlu0 %v833
      %v835 = vpop.xlane.xlu0 %834
      %v836 = vsel %vm721, %v799, 0.0
      %837 = vadd.xlane.f32.xlu0 %v836
      %v838 = vpop.xlane.xlu0 %837
      %v839 = vsel %vm721, %v801, 0.0
      %840 = vadd.xlane.f32.xlu0 %v839
      %v841 = vpop.xlane.xlu0 %840
      %v842 = vsel %vm721, %v803, 0.0
      %843 = vadd.xlane.f32.xlu0 %v842
      %v844 = vpop.xlane.xlu0 %843
      %v845 = vsel %vm721, %v805, 0.0
      %846 = vadd.xlane.f32.xlu0 %v845
      %v847 = vpop.xlane.xlu0 %846
      %v848 = vsel %vm721, %v807, 0.0
      %849 = vadd.xlane.f32.xlu0 %v848
      %v850 = vpop.xlane.xlu0 %849
      %v851 = vsel %vm721, %v809, 0.0
      %852 = vadd.xlane.f32.xlu0 %v851
      %v853 = vpop.xlane.xlu0 %852
      %v854 = vsel %vm721, %v811, 0.0
      %855 = vadd.xlane.f32.xlu0 %v854
      %v856 = vpop.xlane.xlu0 %855
      %v857 = vsel %vm721, %v813, 0.0
      %858 = vadd.xlane.f32.xlu0 %v857
      %v859 = vpop.xlane.xlu0 %858
      %v860 = vsel %vm721, %v815, 0.0
      %861 = vadd.xlane.f32.xlu0 %v860
      %v862 = vpop.xlane.xlu0 %861
      %v863 = vsel %vm721, %v817, 0.0
      %864 = vadd.xlane.f32.xlu0 %v863
      %v865 = vpop.xlane.xlu0 %864
      %v866 = vrcp.pop %v820
      %v867 = vmul.f32 %v820, %v866
      %v868 = vsub.f32 1.0, %v867
      %v869 = vmul.f32 %v866, %v868
      %v870 = vadd.f32 %v866, %v869
      %vm871 = vweird.f32 %v820
      %vm872 = vweird.f32 %v866
      %vm873 = vmor %vm871, %vm872
      %v874 = vsel %vm873, %v866, %v870
      %v875 = vand.u32 2147483647, %v820
      %vm876 = vcmp.eq.f32.partialorder %v875, 8.507059e+37
      %v877 = vand.u32 %v820, 2147483648
      %v878 = vor.u32 1.1754944e-38, %v877
      %v879 = vsel %vm876, %v878, %v874
      %v880 = vmul.f32 %v787, %v879
      %v881 = vrcp.pop %v823
      %v882 = vmul.f32 %v823, %v881
      %v883 = vsub.f32 1.0, %v882
      %v884 = vmul.f32 %v881, %v883
      %v885 = vadd.f32 %v881, %v884
      %vm886 = vweird.f32 %v823
      %vm887 = vweird.f32 %v881
      %vm888 = vmor %vm886, %vm887
      %v889 = vsel %vm888, %v881, %v885
      %v890 = vand.u32 2147483647, %v823
      %vm891 = vcmp.eq.f32.partialorder %v890, 8.507059e+37
      %v892 = vand.u32 %v823, 2147483648
      %v893 = vor.u32 1.1754944e-38, %v892
      %v894 = vsel %vm891, %v893, %v889
      %v895 = vmul.f32 %v789, %v894
      %v896 = vrcp.pop %v826
      %v897 = vmul.f32 %v826, %v896
      %v898 = vsub.f32 1.0, %v897
      %v899 = vmul.f32 %v896, %v898
      %v900 = vadd.f32 %v896, %v899
      %vm901 = vweird.f32 %v826
      %vm902 = vweird.f32 %v896
      %vm903 = vmor %vm901, %vm902
      %v904 = vsel %vm903, %v896, %v900
      %v905 = vand.u32 2147483647, %v826
      %vm906 = vcmp.eq.f32.partialorder %v905, 8.507059e+37
      %v907 = vand.u32 %v826, 2147483648
      %v908 = vor.u32 1.1754944e-38, %v907
      %v909 = vsel %vm906, %v908, %v904
      %v910 = vmul.f32 %v791, %v909
      %v911 = vrcp.pop %v829
      %v912 = vmul.f32 %v829, %v911
      %v913 = vsub.f32 1.0, %v912
      %v914 = vmul.f32 %v911, %v913
      %v915 = vadd.f32 %v911, %v914
      %vm916 = vweird.f32 %v829
      %vm917 = vweird.f32 %v911
      %vm918 = vmor %vm916, %vm917
      %v919 = vsel %vm918, %v911, %v915
      %v920 = vand.u32 2147483647, %v829
      %vm921 = vcmp.eq.f32.partialorder %v920, 8.507059e+37
      %v922 = vand.u32 %v829, 2147483648
      %v923 = vor.u32 1.1754944e-38, %v922
      %v924 = vsel %vm921, %v923, %v919
      %v925 = vmul.f32 %v793, %v924
      %v926 = vrcp.pop %v832
      %v927 = vmul.f32 %v832, %v926
      %v928 = vsub.f32 1.0, %v927
      %v929 = vmul.f32 %v926, %v928
      %v930 = vadd.f32 %v926, %v929
      %vm931 = vweird.f32 %v832
      %vm932 = vweird.f32 %v926
      %vm933 = vmor %vm931, %vm932
      %v934 = vsel %vm933, %v926, %v930
      %v935 = vand.u32 2147483647, %v832
      %vm936 = vcmp.eq.f32.partialorder %v935, 8.507059e+37
      %v937 = vand.u32 %v832, 2147483648
      %v938 = vor.u32 1.1754944e-38, %v937
      %v939 = vsel %vm936, %v938, %v934
      %v940 = vmul.f32 %v795, %v939
      %v941 = vrcp.pop %v835
      %v942 = vmul.f32 %v835, %v941
      %v943 = vsub.f32 1.0, %v942
      %v944 = vmul.f32 %v941, %v943
      %v945 = vadd.f32 %v941, %v944
      %vm946 = vweird.f32 %v835
      %vm947 = vweird.f32 %v941
      %vm948 = vmor %vm946, %vm947
      %v949 = vsel %vm948, %v941, %v945
      %v950 = vand.u32 2147483647, %v835
      %vm951 = vcmp.eq.f32.partialorder %v950, 8.507059e+37
      %v952 = vand.u32 %v835, 2147483648
      %v953 = vor.u32 1.1754944e-38, %v952
      %v954 = vsel %vm951, %v953, %v949
      %v955 = vmul.f32 %v797, %v954
      %v956 = vrcp.pop %v838
      %v957 = vmul.f32 %v838, %v956
      %v958 = vsub.f32 1.0, %v957
      %v959 = vmul.f32 %v956, %v958
      %v960 = vadd.f32 %v956, %v959
      %vm961 = vweird.f32 %v838
      %vm962 = vweird.f32 %v956
      %vm963 = vmor %vm961, %vm962
      %v964 = vsel %vm963, %v956, %v960
      %v965 = vand.u32 2147483647, %v838
      %vm966 = vcmp.eq.f32.partialorder %v965, 8.507059e+37
      %v967 = vand.u32 %v838, 2147483648
      %v968 = vor.u32 1.1754944e-38, %v967
      %v969 = vsel %vm966, %v968, %v964
      %v970 = vmul.f32 %v799, %v969
      %v971 = vrcp.pop %v841
      %v972 = vmul.f32 %v841, %v971
      %v973 = vsub.f32 1.0, %v972
      %v974 = vmul.f32 %v971, %v973
      %v975 = vadd.f32 %v971, %v974
      %vm976 = vweird.f32 %v841
      %vm977 = vweird.f32 %v971
      %vm978 = vmor %vm976, %vm977
      %v979 = vsel %vm978, %v971, %v975
      %v980 = vand.u32 2147483647, %v841
      %vm981 = vcmp.eq.f32.partialorder %v980, 8.507059e+37
      %v982 = vand.u32 %v841, 2147483648
      %v983 = vor.u32 1.1754944e-38, %v982
      %v984 = vsel %vm981, %v983, %v979
      %v985 = vmul.f32 %v801, %v984
      %v986 = vrcp.pop %v844
      %v987 = vmul.f32 %v844, %v986
      %v988 = vsub.f32 1.0, %v987
      %v989 = vmul.f32 %v986, %v988
      %v990 = vadd.f32 %v986, %v989
      %vm991 = vweird.f32 %v844
      %vm992 = vweird.f32 %v986
      %vm993 = vmor %vm991, %vm992
      %v994 = vsel %vm993, %v986, %v990
      %v995 = vand.u32 2147483647, %v844
      %vm996 = vcmp.eq.f32.partialorder %v995, 8.507059e+37
      %v997 = vand.u32 %v844, 2147483648
      %v998 = vor.u32 1.1754944e-38, %v997
      %v999 = vsel %vm996, %v998, %v994
      %v1000 = vmul.f32 %v803, %v999
      %v1001 = vrcp.pop %v847
      %v1002 = vmul.f32 %v847, %v1001
      %v1003 = vsub.f32 1.0, %v1002
      %v1004 = vmul.f32 %v1001, %v1003
      %v1005 = vadd.f32 %v1001, %v1004
      %vm1006 = vweird.f32 %v847
      %vm1007 = vweird.f32 %v1001
      %vm1008 = vmor %vm1006, %vm1007
      %v1009 = vsel %vm1008, %v1001, %v1005
      %v1010 = vand.u32 2147483647, %v847
      %vm1011 = vcmp.eq.f32.partialorder %v1010, 8.507059e+37
      %v1012 = vand.u32 %v847, 2147483648
      %v1013 = vor.u32 1.1754944e-38, %v1012
      %v1014 = vsel %vm1011, %v1013, %v1009
      %v1015 = vmul.f32 %v805, %v1014
      %v1016 = vrcp.pop %v850
      %v1017 = vmul.f32 %v850, %v1016
      %v1018 = vsub.f32 1.0, %v1017
      %v1019 = vmul.f32 %v1016, %v1018
      %v1020 = vadd.f32 %v1016, %v1019
      %vm1021 = vweird.f32 %v850
      %vm1022 = vweird.f32 %v1016
      %vm1023 = vmor %vm1021, %vm1022
      %v1024 = vsel %vm1023, %v1016, %v1020
      %v1025 = vand.u32 2147483647, %v850
      %vm1026 = vcmp.eq.f32.partialorder %v1025, 8.507059e+37
      %v1027 = vand.u32 %v850, 2147483648
      %v1028 = vor.u32 1.1754944e-38, %v1027
      %v1029 = vsel %vm1026, %v1028, %v1024
      %v1030 = vmul.f32 %v807, %v1029
      %v1031 = vrcp.pop %v853
      %v1032 = vmul.f32 %v853, %v1031
      %v1033 = vsub.f32 1.0, %v1032
      %v1034 = vmul.f32 %v1031, %v1033
      %v1035 = vadd.f32 %v1031, %v1034
      %vm1036 = vweird.f32 %v853
      %vm1037 = vweird.f32 %v1031
      %vm1038 = vmor %vm1036, %vm1037
      %v1039 = vsel %vm1038, %v1031, %v1035
      %v1040 = vand.u32 2147483647, %v853
      %vm1041 = vcmp.eq.f32.partialorder %v1040, 8.507059e+37
      %v1042 = vand.u32 %v853, 2147483648
      %v1043 = vor.u32 1.1754944e-38, %v1042
      %v1044 = vsel %vm1041, %v1043, %v1039
      %v1045 = vmul.f32 %v809, %v1044
      %v1046 = vrcp.pop %v856
      %v1047 = vmul.f32 %v856, %v1046
      %v1048 = vsub.f32 1.0, %v1047
      %v1049 = vmul.f32 %v1046, %v1048
      %v1050 = vadd.f32 %v1046, %v1049
      %vm1051 = vweird.f32 %v856
      %vm1052 = vweird.f32 %v1046
      %vm1053 = vmor %vm1051, %vm1052
      %v1054 = vsel %vm1053, %v1046, %v1050
      %v1055 = vand.u32 2147483647, %v856
      %vm1056 = vcmp.eq.f32.partialorder %v1055, 8.507059e+37
      %v1057 = vand.u32 %v856, 2147483648
      %v1058 = vor.u32 1.1754944e-38, %v1057
      %v1059 = vsel %vm1056, %v1058, %v1054
      %v1060 = vmul.f32 %v811, %v1059
      %v1061 = vrcp.pop %v859
      %v1062 = vmul.f32 %v859, %v1061
      %v1063 = vsub.f32 1.0, %v1062
      %v1064 = vmul.f32 %v1061, %v1063
      %v1065 = vadd.f32 %v1061, %v1064
      %vm1066 = vweird.f32 %v859
      %vm1067 = vweird.f32 %v1061
      %vm1068 = vmor %vm1066, %vm1067
      %v1069 = vsel %vm1068, %v1061, %v1065
      %v1070 = vand.u32 2147483647, %v859
      %vm1071 = vcmp.eq.f32.partialorder %v1070, 8.507059e+37
      %v1072 = vand.u32 %v859, 2147483648
      %v1073 = vor.u32 1.1754944e-38, %v1072
      %v1074 = vsel %vm1071, %v1073, %v1069
      %v1075 = vmul.f32 %v813, %v1074
      %v1076 = vrcp.pop %v862
      %v1077 = vmul.f32 %v862, %v1076
      %v1078 = vsub.f32 1.0, %v1077
      %v1079 = vmul.f32 %v1076, %v1078
      %v1080 = vadd.f32 %v1076, %v1079
      %vm1081 = vweird.f32 %v862
      %vm1082 = vweird.f32 %v1076
      %vm1083 = vmor %vm1081, %vm1082
      %v1084 = vsel %vm1083, %v1076, %v1080
      %v1085 = vand.u32 2147483647, %v862
      %vm1086 = vcmp.eq.f32.partialorder %v1085, 8.507059e+37
      %v1087 = vand.u32 %v862, 2147483648
      %v1088 = vor.u32 1.1754944e-38, %v1087
      %v1089 = vsel %vm1086, %v1088, %v1084
      %v1090 = vmul.f32 %v815, %v1089
      %v1091 = vrcp.pop %v865
      %v1092 = vmul.f32 %v865, %v1091
      %v1093 = vsub.f32 1.0, %v1092
      %v1094 = vmul.f32 %v1091, %v1093
      %v1095 = vadd.f32 %v1091, %v1094
      %vm1096 = vweird.f32 %v865
      %vm1097 = vweird.f32 %v1091
      %vm1098 = vmor %vm1096, %vm1097
      %v1099 = vsel %vm1098, %v1091, %v1095
      %v1100 = vand.u32 2147483647, %v865
      %vm1101 = vcmp.eq.f32.partialorder %v1100, 8.507059e+37
      %v1102 = vand.u32 %v865, 2147483648
      %v1103 = vor.u32 1.1754944e-38, %v1102
      %v1104 = vsel %vm1101, %v1103, %v1099
      %v1105 = vmul.f32 %v817, %v1104
      %1106 = vst.msk [vmem:[%s201] sm:$0xff] %vm721, %v880
      %1107 = vst.msk [vmem:[%s201 + $0x8] sm:$0xff] %vm721, %v895
      %1108 = vst.msk [vmem:[%s201 + $0x10] sm:$0xff] %vm721, %v910
      %1109 = vst.msk [vmem:[%s201 + $0x18] sm:$0xff] %vm721, %v925
      %1110 = vst.msk [vmem:[%s201 + $0x20] sm:$0xff] %vm721, %v940
      %1111 = vst.msk [vmem:[%s201 + $0x28] sm:$0xff] %vm721, %v955
      %1112 = vst.msk [vmem:[%s201 + $0x30] sm:$0xff] %vm721, %v970
      %1113 = vst.msk [vmem:[%s201 + $0x38] sm:$0xff] %vm721, %v985
      %1114 = vst.msk [vmem:[%s201 + $0x40] sm:$0xff] %vm721, %v1000
      %1115 = vst.msk [vmem:[%s201 + $0x48] sm:$0xff] %vm721, %v1015
      %1116 = vst.msk [vmem:[%s201 + $0x50] sm:$0xff] %vm721, %v1030
      %1117 = vst.msk [vmem:[%s201 + $0x58] sm:$0xff] %vm721, %v1045
      %1118 = vst.msk [vmem:[%s201 + $0x60] sm:$0xff] %vm721, %v1060
      %1119 = vst.msk [vmem:[%s201 + $0x68] sm:$0xff] %vm721, %v1075
      %1120 = vst.msk [vmem:[%s201 + $0x70] sm:$0xff] %vm721, %v1090
      %1121 = vst.msk [vmem:[%s201 + $0x78] sm:$0xff] %vm721, %v1105
      %s1122 = smul.u32 16, %s17
      %p1123 = scmp.lt.s32.totalorder %s1122, 31
      %s1124 = scalar_select %p1123, %s1122, 31
      %s1125 = smul.addr %s1124, 8
      %s1126 = scalar_lea.vmem %s5, %s1125
      // Predicated region
      $region37: #{tpu_custom_call.1} parent=35 // pred_check
        %p1127 = pneg %p124
      $region38: #{tpu_custom_call.1} parent=35 // pred_check_branch
        %1129 = sbr.rel (%p1127) target = $region40
      $region39: #{tpu_custom_call.1} parent=35 // pred_region
        %s1130 = smul.u32 16, %s17
      $region40: #{tpu_custom_call.1} parent=35 // pred_fallthru
        _
    $region36: #{tpu_custom_call.1} parent=5 // pred_fallthru
      _
    %p1131 = scmp.le.s32.totalorder 2, %s12
    // Predicated region
    $region41: #{tpu_custom_call.1} parent=5 // pred_check
      %p1132 = pneg %p1131
    $region42: #{tpu_custom_call.1} parent=5 // pred_check_branch
      %1134 = sbr.rel (%p1132) target = $region44
    $region43: #{tpu_custom_call.1} parent=5 // pred_region
      %s1135 = ssub.s32 %s12, 2
      // Predicated region
      $region45: #{tpu_custom_call.1} parent=43 // pred_check
        %p1136 = pneg %p130
      $region46: #{tpu_custom_call.1} parent=43 // pred_check_branch
        %1138 = sbr.rel (%p1136) target = $region48
      $region47: #{tpu_custom_call.1} parent=43 // pred_region
        %s1139 = smul.u32 16, %s18
        %p1140 = scmp.lt.s32.totalorder %s1139, 31
        %s1141 = scalar_select %p1140, %s1139, 31
        %s1142 = smul.addr %s1141, 8
        %s1143 = scalar_lea.vmem %s5, %s1142
      $region48: #{tpu_custom_call.1} parent=43 // pred_fallthru
        _
    $region44: #{tpu_custom_call.1} parent=5 // pred_fallthru
      _
  $region6: #{tpu_custom_call.1} parent=0 // loop_footer
    %s16 = sadd.s32 1, %s12
  $region7: #{tpu_custom_call.1} parent=0 // loop_footer_branch
    %11 = sbr.rel target = $region3
  $region8: #{tpu_custom_call.1} parent=0 // loop_exit
    _

</llo_original>
